<compile_context>
chip_gen: v7x
topology: tpu7x:2x2x1
jax: 0.10.0
libtpu: 0.0.40
codegen_flags: <defaults>
</compile_context>

<pallas_src>
import functools

import jax
import jax.numpy as jnp
from jax import lax
from jax.experimental import pallas as pl
from jax.experimental.pallas import tpu as pltpu


def _round_up(a: int, b: int) -> int:
    return (a + b - 1) // b * b


# --------------------------------------------------------------------------- #
# One-time weight preparation (run at weight-load time, NOT per forward call)
# --------------------------------------------------------------------------- #
def prepare_lm_head_weight(w, gamma):
    """Fold RMSNorm gamma into the lm_head weight, cast to bf16, transpose to
    [D, V] (so the in-kernel dot_general is plain NN — no weight transpose on the
    XLU), and pad the vocab axis to a lane multiple (128).
    Returns (w_prepared [D, V_pad] bf16, vocab_size)."""
    V, D = w.shape
    w_t = (w.astype(jnp.float32) * gamma.astype(jnp.float32)[None, :]).T   # [D, V]
    w_t = w_t.astype(jnp.bfloat16)
    V_pad = _round_up(V, 128)
    if V_pad != V:
        w_t = jnp.pad(w_t, ((0, 0), (0, V_pad - V)))
    return w_t, V


# --------------------------------------------------------------------------- #
# Generation-aware VMEM budget and tile selection
# --------------------------------------------------------------------------- #
def _vmem_limit_bytes() -> int:
    cap = 64 * 1024 * 1024                       # conservative default (v7x per-TC)
    try:
        info = pltpu.get_tpu_info()
        cap = int(getattr(info, "vmem_capacity_bytes", cap))
    except Exception:
        pass
    # Leave headroom for compiler-internal scratch / pipeline buffers:
    #   v7x (64 MiB)  -> 48 MiB limit;  v5e/v6e (128 MiB) -> 96 MiB limit.
    return max(32 * 1024 * 1024, min(cap * 3 // 4, cap - (16 << 20)))


def _choose_tiles(S, D, V_pad, vmem_limit):
    budget = int(vmem_limit * 0.8)

    def residency(ts, tn):
        # double-buffered: bf16 x tile + bf16 W tile + f32 output tile
        return 2 * (ts * D * 2) + 2 * (D * tn * 2) + 2 * (ts * tn * 4)

    ts_cap = min(_round_up(S, 8), 1024)
    tn_cap = min(_round_up(V_pad, 128), 2048)
    tn_cands = [c for c in (2048, 1024, 512, 256, 128) if c <= tn_cap] or [tn_cap]
    ts_cands = [c for c in (1024, 512, 256, 128, 64, 32, 16, 8) if c <= ts_cap] or [ts_cap]
    ts_floor = min(256, ts_cap)        # keep the MXU M-dimension reasonably fed

    # Big tn first (fewer x re-streams over HBM: x traffic = ceil(V/tn)*S*D*2),
    # then the largest token tile that still fits the VMEM budget.
    for tn in tn_cands:
        for ts in ts_cands:
            if ts >= ts_floor and residency(ts, tn) <= budget:
                return ts, tn
    return ts_cands[-1], tn_cands[-1]


# --------------------------------------------------------------------------- #
# Kernel
# --------------------------------------------------------------------------- #
def _rmsnorm_matmul_kernel(x_ref, w_ref, o_ref, *, eps):
    # RMSNorm recomputed per (vocab-tile, token-tile): O(ts*D) VPU/EUP/XLU work,
    # hidden under the (ts x D x tn) MXU matmul. gamma is folded into W.
    x = x_ref[...].astype(jnp.float32)
    var = jnp.mean(x * x, axis=-1, keepdims=True)
    xn = (x * lax.rsqrt(var + eps)).astype(jnp.bfloat16)
    # Plain NN contraction: xn [ts, D] @ W_tile [D, tn] -> no weight transpose.
    o_ref[...] = lax.dot_general(
        xn, w_ref[...],
        dimension_numbers=(((1,), (0,)), ((), ())),
        preferred_element_type=jnp.float32,
    ).astype(o_ref.dtype)


# --------------------------------------------------------------------------- #
# Forward wrapper
# --------------------------------------------------------------------------- #
def llama_output_embedding(x, w_prepared, vocab_size, *, eps):
    """x: [S, D] f32, w_prepared: [D, V_pad] bf16 (from prepare_lm_head_weight)
    -> logits [S, vocab_size] f32."""
    S, D = x.shape
    D_w, V_pad = w_prepared.shape
    assert D == D_w
    V = vocab_size

    vmem_limit = _vmem_limit_bytes()
    ts, tn = _choose_tiles(S, D, V_pad, vmem_limit)
    nv = pl.cdiv(V_pad, tn)
    ns = pl.cdiv(S, ts)

    # Stream activations as bf16 (halves the x re-stream); norm accumulates in f32.
    x_bf16 = x.astype(jnp.bfloat16)

    kernel = functools.partial(_rmsnorm_matmul_kernel, eps=eps)

    cost = pl.CostEstimate(
        flops=int(2 * S * V_pad * D),
        transcendentals=int(ns * nv * ts),           # rsqrt per row per tile
        bytes_accessed=int(D * V_pad * 2             # W streamed exactly once
                           + nv * S * D * 2          # x re-streamed per vocab tile
                           + S * V * 4),             # f32 logits writeback
    )

    out = pl.pallas_call(
        kernel,
        out_shape=jax.ShapeDtypeStruct((S, V), jnp.float32),
        grid_spec=pltpu.PrefetchScalarGridSpec(
            num_scalar_prefetch=0,
            # Vocab axis OUTER + parallel: each TensorCore streams a disjoint slice
            # of W once per call (decode gets both cores busy); token axis inner so
            # each resident W tile is reused across all token tiles.
            grid=(nv, ns),
            in_specs=[
                pl.BlockSpec((ts, D), lambda j, i: (i, 0)),   # x token tile (bf16)
                pl.BlockSpec((D, tn), lambda j, i: (0, j)),   # W vocab tile [D, tn]
            ],
            out_specs=pl.BlockSpec((ts, tn), lambda j, i: (i, j)),
        ),
        compiler_params=pltpu.CompilerParams(
            dimension_semantics=("parallel", "arbitrary"),
            vmem_limit_bytes=int(vmem_limit),
        ),
        cost_estimate=cost,
    )(x_bf16, w_prepared)
    return out


def reference(x, gamma, w, eps):
    xf = x.astype(jnp.float32)
    var = jnp.mean(xf * xf, axis=-1, keepdims=True)
    xn = xf * lax.rsqrt(var + eps) * gamma.astype(jnp.float32)
    return xn @ w.T


if __name__ == "__main__":
    eps = 1e-5
    key = jax.random.PRNGKey(0)
    kx, kg, kw, kx2, kw2 = jax.random.split(key, 5)

    # Small shapes consistent with the module: seq=8, embed_dim=128, vocab=256.
    S, D, V = 8, 128, 256
    x = jax.random.normal(kx, (S, D), dtype=jnp.float32)
    gamma = 1.0 + 0.01 * jax.random.normal(kg, (D,), dtype=jnp.float32)
    w = 0.02 * jax.random.normal(kw, (V, D), dtype=jnp.float32)

    w_prep, V_true = prepare_lm_head_weight(w, gamma)     # one-time weight prep
    logits = jax.block_until_ready(
        llama_output_embedding(x, w_prep, V_true, eps=eps))
    ref = reference(x, gamma, w, eps)
    assert logits.shape == (S, V) and logits.dtype == jnp.float32
    # bf16 activation/weight streaming => ~bf16-epsilon error on O(0.2) logits.
    assert jnp.max(jnp.abs(logits - ref)) < 2.5e-2

    # Ragged shapes (exercise the partial-block path): seq=13, vocab=250.
    S2, V2 = 13, 250
    x2 = jax.random.normal(kx2, (S2, D), dtype=jnp.float32)
    w2 = 0.02 * jax.random.normal(kw2, (V2, D), dtype=jnp.float32)
    w2_prep, V2_true = prepare_lm_head_weight(w2, gamma)
    logits2 = jax.block_until_ready(
        llama_output_embedding(x2, w2_prep, V2_true, eps=eps))
    ref2 = reference(x2, gamma, w2, eps)
    assert logits2.shape == (S2, V2) and logits2.dtype == jnp.float32
    assert jnp.max(jnp.abs(logits2 - ref2)) < 2.5e-2

    print("KERNEL_OK")
</pallas_src>

<mosaic_0001>
module attributes {stable_mosaic.version = 11 : i64} {
  func.func @_rmsnorm_matmul_kernel(%arg0: i32, %arg1: i32, %arg2: memref<8x128xbf16, #tpu.memory_space<vmem>>, %arg3: memref<128x256xbf16, #tpu.memory_space<vmem>>, %arg4: memref<8x256xf32, #tpu.memory_space<vmem>>) attributes {dimension_semantics = [#tpu.dimension_semantics<parallel>, #tpu.dimension_semantics<arbitrary>], iteration_bounds = array<i64: 1, 1>, scalar_prefetch = 0 : i64, scratch_operands = 0 : i64, tpu.core_type = #tpu.core_type<tc>, window_params = [{transform_indices = @transform_0, window_bounds = array<i64: 8, 128>}, {transform_indices = @transform_1, window_bounds = array<i64: 128, 256>}, {transform_indices = @transform_2, window_bounds = array<i64: 8, 256>}]} {
    %c0 = arith.constant 0 : index
    %c0_0 = arith.constant 0 : index
    %0 = vector.load %arg2[%c0, %c0_0] : memref<8x128xbf16, #tpu.memory_space<vmem>>, vector<8x128xbf16>
    %1 = arith.extf %0 : vector<8x128xbf16> to vector<8x128xf32>
    %2 = arith.mulf %1, %1 : vector<8x128xf32>
    %cst = arith.constant dense<0.000000e+00> : vector<8xf32>
    %3 = vector.multi_reduction <add>, %2, %cst [1] : vector<8x128xf32> to vector<8xf32>
    %4 = vector.shape_cast %3 : vector<8xf32> to vector<8x1xf32>
    %cst_1 = arith.constant 1.280000e+02 : f32
    %5 = vector.broadcast %cst_1 : f32 to vector<8x1xf32>
    %6 = arith.divf %4, %5 : vector<8x1xf32>
    %cst_2 = arith.constant 9.99999974E-6 : f32
    %7 = vector.broadcast %cst_2 : f32 to vector<8x1xf32>
    %8 = arith.addf %6, %7 : vector<8x1xf32>
    %9 = math.rsqrt %8 : vector<8x1xf32>
    %10 = vector.broadcast %9 : vector<8x1xf32> to vector<8x128xf32>
    %11 = arith.mulf %1, %10 : vector<8x128xf32>
    %12 = arith.truncf %11 : vector<8x128xf32> to vector<8x128xbf16>
    %c0_3 = arith.constant 0 : index
    %c0_4 = arith.constant 0 : index
    %13 = vector.load %arg3[%c0_3, %c0_4] : memref<128x256xbf16, #tpu.memory_space<vmem>>, vector<128x256xbf16>
    %cst_5 = arith.constant dense<0.000000e+00> : vector<8x256xf32>
    %14 = tpu.matmul %12, %13, %cst_5 {dimension_numbers = #tpu.dot_dimension_numbers<[1], [0], [0], [1], [0, 0, 1, 1], [], []>} : vector<8x128xbf16>, vector<128x256xbf16>, vector<8x256xf32> -> vector<8x256xf32>
    %c0_6 = arith.constant 0 : index
    %c0_7 = arith.constant 0 : index
    %15 = vector.load %arg4[%c0_6, %c0_7] : memref<8x256xf32, #tpu.memory_space<vmem>>, vector<8x256xf32>
    tpu.vector_store %arg4[%c0_6, %c0_7], %14 {strides = array<i32>} : memref<8x256xf32, #tpu.memory_space<vmem>>, vector<8x256xf32>,
    return
  }
  func.func @transform_0(%arg0: i32, %arg1: i32) -> (i32, i32) {
    %c0_i32 = arith.constant 0 : i32
    %c0_i32_0 = arith.constant 0 : i32
    return %arg1, %c0_i32 : i32, i32
  }
  func.func @transform_1(%arg0: i32, %arg1: i32) -> (i32, i32) {
    %c0_i32 = arith.constant 0 : i32
    %c0_i32_0 = arith.constant 0 : i32
    return %c0_i32, %arg0 : i32, i32
  }
  func.func @transform_2(%arg0: i32, %arg1: i32) -> (i32, i32) {
    %c0_i32 = arith.constant 0 : i32
    return %arg1, %arg0 : i32, i32
  }
}

</mosaic_0001>

<llo_original>
// kernel: tpu_custom_call.1
$region0: #{tpu_custom_call.1}
  #allocation0 [shape = 'u32[]', space=smem, size = 0x4, offset = 0x4, fixed_abs, tag = 'smem constant byte address 0x4 - core index']
  #allocation1 [shape = 'u32[144,128]{1,0:T(1,128)}', space=vmem, size = 0x12000, scoped, tag = 'internal scratch']
  %s0 = inlined_call_operand.hbm [shape: bf16[8,128], index: 0, kind: input, shape index: {}]
  %s1 = inlined_call_operand.hbm [shape: bf16[128,256], index: 1, kind: input, shape index: {}]
  %s2 = inlined_call_operand.hbm [shape: f32[8,256], index: 2, kind: output, shape index: {}]
  %s3 = sld [smem:[#allocation0]]
  $region26: #{tpu_custom_call.1} parent=0
    _
  %s5 = ssub.s32 1, %s3
  %s6 = scalar_select 0, %s5, %s3
  $region1: #{tpu_custom_call.1} parent=0
    #allocation2 [shape = 'u8[2048]{0}', space=vmem, size = 0x800, scoped, tag = 'input window, operand 0, single buffered']
    #allocation3 [shape = 's32[1]{0}', space=sflag, size = 0x4, scoped, tag = 'scoped memory for tpu_custom_call.1']
    #allocation4 [shape = 's32[1]{0}', space=sflag, size = 0x4, scoped, tag = 'scoped memory for tpu_custom_call.1']
    #allocation5 [shape = 'u8[65536]{0}', space=vmem, size = 0x10000, scoped, tag = 'input window, operand 1, single buffered']
    #allocation6 [shape = 's32[1]{0}', space=sflag, size = 0x4, scoped, tag = 'scoped memory for tpu_custom_call.1']
    #allocation7 [shape = 'u8[8192]{0}', space=vmem, size = 0x2000, scoped, tag = 'output window, operand 0, single buffered']
    %7 = vsyncpa [#allocation3], 0
    %8 = vsyncpa [#allocation6], 0
    %9 = vsyncpa [#allocation4], 0
    // Predicated region
    $region2: #{tpu_custom_call.1} parent=1 // pred_check
      _
    $region3: #{tpu_custom_call.1} parent=1 // pred_check_branch
      %11 = sbr.rel (0) target = $region5
    $region4: #{tpu_custom_call.1} parent=1 // pred_region
      %s13 = ssub.s32 64, 64
      %14 = vsyncadd [#allocation3], %s13
      %s16 = sshll.u32 [#allocation2], 4
      %s17 = int_to_ptr.vmem [resolvable:$true] %s16
      %19 = dma.hbm_to_vmem [thread:$0]  %s0, 64, %s17, [#allocation3]
    $region5: #{tpu_custom_call.1} parent=1 // pred_fallthru
      _
    // Predicated region
    $region6: #{tpu_custom_call.1} parent=1 // pred_check
      _
    $region7: #{tpu_custom_call.1} parent=1 // pred_check_branch
      %21 = sbr.rel (0) target = $region9
    $region8: #{tpu_custom_call.1} parent=1 // pred_region
      %s23 = ssub.s32 2048, 2048
      %24 = vsyncadd [#allocation6], %s23
      %s25 = sshll.u32 [#allocation5], 4
      %s26 = int_to_ptr.vmem [resolvable:$true] %s25
      %31 = dma.hbm_to_vmem [thread:$0]  %s1, 2048, %s26, [#allocation6], 128, 128, 8
    $region9: #{tpu_custom_call.1} parent=1 // pred_fallthru
      _
    // Predicated region
    $region10: #{tpu_custom_call.1} parent=1 // pred_check
      _
    $region11: #{tpu_custom_call.1} parent=1 // pred_check_branch
      %33 = sbr.rel (0) target = $region13
    $region12: #{tpu_custom_call.1} parent=1 // pred_region
      %34 = dma.done [#allocation3], 64
    $region13: #{tpu_custom_call.1} parent=1 // pred_fallthru
      _
    // Predicated region
    $region14: #{tpu_custom_call.1} parent=1 // pred_check
      _
    $region15: #{tpu_custom_call.1} parent=1 // pred_check_branch
      %36 = sbr.rel (0) target = $region17
    $region16: #{tpu_custom_call.1} parent=1 // pred_region
      %37 = dma.done [#allocation6], 2048
    $region17: #{tpu_custom_call.1} parent=1 // pred_fallthru
      _
    %v39 = vld [vmem:[#allocation2] sm:$0xf]
    %v40 = vunpack.c.l.bf16 %v39
    %v41 = vmul.f32 %v40, %v40
    %42 = vadd.xlane.f32.xlu0 %v41
    %v43 = vpop.xlane.xlu0 %42
    %v44 = vrcp.pop 128.0
    %v45 = vmul.f32 %v43, %v44
    %v46 = vadd.f32 %v45, 1e-05
    %v47 = vrsqrt.pop %v46
    %v48 = vmul.f32 %v40, %v47
    %v49 = vpack.c.bf16 %v48, %v48
    %v50 = vld [vmem:[#allocation5] sm:$0xff]
    %v51 = vld [vmem:[#allocation5 + $0x8] sm:$0xff]
    %v52 = vld [vmem:[#allocation5 + $0x10] sm:$0xff]
    %v53 = vld [vmem:[#allocation5 + $0x18] sm:$0xff]
    %v54 = vld [vmem:[#allocation5 + $0x20] sm:$0xff]
    %v55 = vld [vmem:[#allocation5 + $0x28] sm:$0xff]
    %v56 = vld [vmem:[#allocation5 + $0x30] sm:$0xff]
    %v57 = vld [vmem:[#allocation5 + $0x38] sm:$0xff]
    %v58 = vld [vmem:[#allocation5 + $0x40] sm:$0xff]
    %v59 = vld [vmem:[#allocation5 + $0x48] sm:$0xff]
    %v60 = vld [vmem:[#allocation5 + $0x50] sm:$0xff]
    %v61 = vld [vmem:[#allocation5 + $0x58] sm:$0xff]
    %v62 = vld [vmem:[#allocation5 + $0x60] sm:$0xff]
    %v63 = vld [vmem:[#allocation5 + $0x68] sm:$0xff]
    %v64 = vld [vmem:[#allocation5 + $0x70] sm:$0xff]
    %v65 = vld [vmem:[#allocation5 + $0x78] sm:$0xff]
    %v82 = vunpack.c.l.b16 %v50
    %v83 = vunpack.c.h.b16 %v50
    %v84 = vunpack.c.l.b16 %v51
    %v85 = vunpack.c.h.b16 %v51
    %v86 = vunpack.c.l.b16 %v52
    %v87 = vunpack.c.h.b16 %v52
    %v88 = vunpack.c.l.b16 %v53
    %v89 = vunpack.c.h.b16 %v53
    %v90 = vunpack.c.l.b16 %v54
    %v91 = vunpack.c.h.b16 %v54
    %v92 = vunpack.c.l.b16 %v55
    %v93 = vunpack.c.h.b16 %v55
    %v94 = vunpack.c.l.b16 %v56
    %v95 = vunpack.c.h.b16 %v56
    %v96 = vunpack.c.l.b16 %v57
    %v97 = vunpack.c.h.b16 %v57
    %v98 = vunpack.c.l.b16 %v58
    %v99 = vunpack.c.h.b16 %v58
    %v100 = vunpack.c.l.b16 %v59
    %v101 = vunpack.c.h.b16 %v59
    %v102 = vunpack.c.l.b16 %v60
    %v103 = vunpack.c.h.b16 %v60
    %v104 = vunpack.c.l.b16 %v61
    %v105 = vunpack.c.h.b16 %v61
    %v106 = vunpack.c.l.b16 %v62
    %v107 = vunpack.c.h.b16 %v62
    %v108 = vunpack.c.l.b16 %v63
    %v109 = vunpack.c.h.b16 %v63
    %v110 = vunpack.c.l.b16 %v64
    %v111 = vunpack.c.h.b16 %v64
    %v112 = vunpack.c.l.b16 %v65
    %v113 = vunpack.c.h.b16 %v65
    %v114 = vpack.c.b16 %v84, %v82
    %v115 = vpack.c.b16 %v85, %v83
    %v116 = vpack.c.b16 %v88, %v86
    %v117 = vpack.c.b16 %v89, %v87
    %v118 = vpack.c.b16 %v92, %v90
    %v119 = vpack.c.b16 %v93, %v91
    %v120 = vpack.c.b16 %v96, %v94
    %v121 = vpack.c.b16 %v97, %v95
    %v122 = vpack.c.b16 %v100, %v98
    %v123 = vpack.c.b16 %v101, %v99
    %v124 = vpack.c.b16 %v104, %v102
    %v125 = vpack.c.b16 %v105, %v103
    %v126 = vpack.c.b16 %v108, %v106
    %v127 = vpack.c.b16 %v109, %v107
    %v128 = vpack.c.b16 %v112, %v110
    %v129 = vpack.c.b16 %v113, %v111
    %146 = vmatprep.subr.bf16.mxu0 %v115
    %147 = vmatpush1.bf16.msra.mxu0 %v114
    %148 = vmatprep.subr.bf16.mxu0 %v117
    %149 = vmatpush1.bf16.msra.mxu0 %v116
    %150 = vmatprep.subr.bf16.mxu0 %v119
    %151 = vmatpush1.bf16.msra.mxu0 %v118
    %152 = vmatprep.subr.bf16.mxu0 %v121
    %153 = vmatpush1.bf16.msra.mxu0 %v120
    %154 = vmatprep.subr.bf16.mxu0 %v123
    %155 = vmatpush1.bf16.msra.mxu0 %v122
    %156 = vmatprep.subr.bf16.mxu0 %v125
    %157 = vmatpush1.bf16.msra.mxu0 %v124
    %158 = vmatprep.subr.bf16.mxu0 %v127
    %159 = vmatpush1.bf16.msra.mxu0 %v126
    %160 = vmatprep.subr.bf16.mxu0 %v129
    %161 = vmatpush1.bf16.msra.mxu0 %v128
    %162 = vmatprep.subr.bf16.mxu0 0
    %163 = vmatpush1.bf16.msra.mxu0 0
    %164 = vmatprep.subr.bf16.mxu0 0
    %165 = vmatpush1.bf16.msra.mxu0 0
    %166 = vmatprep.subr.bf16.mxu0 0
    %167 = vmatpush1.bf16.msra.mxu0 0
    %168 = vmatprep.subr.bf16.mxu0 0
    %169 = vmatpush1.bf16.msra.mxu0 0
    %170 = vmatprep.subr.bf16.mxu0 0
    %171 = vmatpush1.bf16.msra.mxu0 0
    %172 = vmatprep.subr.bf16.mxu0 0
    %173 = vmatpush1.bf16.msra.mxu0 0
    %174 = vmatprep.subr.bf16.mxu0 0
    %175 = vmatpush1.bf16.msra.mxu0 0
    %176 = vmatprep.subr.bf16.mxu0 0
    %177 = vmatpush1.bf16.msra.mxu0 0
    %178 = vmatprep.mubr.bf16.mxu0 0
    %179 = vmatmul.mubr.bf16.gmra.mrb[0].mxu0 %v49
    %v180 = vpop.f32.mrb[0].mxu0
    %v181 = vadd.f32 0.0, %v180
    %v182 = vpop.f32.mrb[0].mxu0
    %v183 = vadd.f32 0.0, %v182
    %v184 = vpop.f32.mrb[0].mxu0
    %v185 = vpop.f32.mrb[0].mxu0
    %186 = vdwg.mxu0
    %187 = vst [vmem:[#allocation7] sm:$0xff] %v181
    %188 = vst [vmem:[#allocation7 + $0x8] sm:$0xff] %v183
    // Predicated region
    $region18: #{tpu_custom_call.1} parent=1 // pred_check
      _
    $region19: #{tpu_custom_call.1} parent=1 // pred_check_branch
      %190 = sbr.rel (0) target = $region21
    $region20: #{tpu_custom_call.1} parent=1 // pred_region
      %s192 = ssub.s32 256, 256
      %193 = vsyncadd [#allocation4], %s192
      %s195 = sshll.u32 [#allocation7], 4
      %s196 = int_to_ptr.vmem [resolvable:$true] %s195
      %198 = dma.vmem_to_hbm [thread:$0]  %s196, 256, %s2, [#allocation4]
    $region21: #{tpu_custom_call.1} parent=1 // pred_fallthru
      _
    // Predicated region
    $region22: #{tpu_custom_call.1} parent=1 // pred_check
      _
    $region23: #{tpu_custom_call.1} parent=1 // pred_check_branch
      %200 = sbr.rel (0) target = $region25
    $region24: #{tpu_custom_call.1} parent=1 // pred_region
      %201 = dma.done [#allocation4], 256
    $region25: #{tpu_custom_call.1} parent=1 // pred_fallthru
      _
    %202 = vsyncpa [#allocation3], 1
    %203 = vsyncpa [#allocation6], 1
    %204 = vsyncpa [#allocation4], 1

</llo_original>
